<compile_context>
chip_gen: v7x
topology: tpu7x:2x2x1
jax: 0.10.0
libtpu: 0.0.40
codegen_flags: <defaults>
</compile_context>

<pallas_src>
import functools

import jax
import jax.numpy as jnp
from jax import lax
from jax.experimental import pallas as pl
from jax.experimental.pallas import tpu as pltpu


def _dw_pw_bn_relu_kernel(x_ref, wdw_ref, bdw_ref, wps_ref, b_ref, m_ref,
                          o_ref, frame_ref, *, Nb, Cin, Cout, H, W, off):
    # x_ref    : (Nb*Cin, H*Wp)   input rows, W already zero-padded to Wp = W+2 (f32)
    # wdw_ref  : (Nb*Cin, 9)      depthwise 3x3 weights (tiled over Nb), tap k=(a+1)*3+(b+1)
    # bdw_ref  : (Nb*Cin, 1)      depthwise bias (tiled over Nb)
    # wps_ref  : (Cout, Cin)      pointwise 1x1 weights with BN scale folded in (f32)
    # b_ref    : (Cout, 1)        fused bias  (b_pw - mean) * scale + beta
    # m_ref    : (1, Sout)        1.0 on interior of the padded output frame, 0.0 border
    # o_ref    : (Nb*Cout, Sout)  flat padded output, Sout = (H+2)*(W+2)
    # frame_ref: VMEM (Nb*Cin, off + Sout + off) f32 scratch (padded-frame coordinates)
    Wp = W + 2
    Sout = (H + 2) * Wp
    slab = off + Wp                       # multiple of 128 -> lane-aligned slab store

    # --- 1. refresh zero strips + one lane-aligned slab copy (no per-row stores) ----
    rows = x_ref.shape[0]                                   # Nb*Cin
    zeros_strip = jnp.zeros((rows, slab), frame_ref.dtype)
    frame_ref[:, 0:slab] = zeros_strip                      # left margin + top pad row
    frame_ref[:, off + (H + 1) * Wp:off + Sout + off] = zeros_strip  # bottom row + right margin
    frame_ref[:, slab:slab + H * Wp] = x_ref[...]           # W-padded interior rows

    # --- 2. depthwise 3x3: 9 lane-shifted reads, f32 VPU MACs -----------------------
    wdw = wdw_ref[...]                                      # (Nb*Cin, 9), loaded once
    acc = None
    k = 0
    for a in (-1, 0, 1):
        for b in (-1, 0, 1):
            d = a * Wp + b
            tap = frame_ref[:, off + d:off + d + Sout]      # (Nb*Cin, Sout)
            term = wdw[:, k:k + 1] * tap
            acc = term if acc is None else acc + term
            k += 1
    # depthwise bias on the interior; zero border = what conv_point's padding=1 sees.
    dw = (acc + bdw_ref[...]) * m_ref[...]                  # (Nb*Cin, Sout) f32

    # --- 3. pointwise 1x1 as Cout x Cin f32 broadcast-FMAs on the VPU (per image) ---
    # MXU dropped on purpose: M=Cout, K=Cin are tiny; f32 FMAs are exact and cheaper.
    wps = wps_ref[...]                                      # (Cout, Cin), BN scale folded
    wcols = [wps[:, ci:ci + 1] for ci in range(Cin)]        # hoisted lane extracts
    bias = b_ref[...]                                       # (Cout, 1)
    for n in range(Nb):
        y = None
        for ci in range(Cin):
            row = dw[n * Cin + ci:n * Cin + ci + 1, :]      # (1, Sout)
            t = wcols[ci] * row                             # (Cout,1)*(1,Sout) -> (Cout,Sout)
            y = t if y is None else y + t
        y = jnp.maximum(y + bias, 0.0)                      # BN bias + ReLU
        o_ref[n * Cout:(n + 1) * Cout, :] = y.astype(o_ref.dtype)   # lane-dense store


def depth_wise_conv(x_nchw, params, eps=1e-5, max_images_per_step=8,
                    out_dtype=jnp.float32):
    """Forward pass of Depth_Wise_Conv. Input/output are NCHW (PyTorch convention)."""
    w_dw, b_dw = params["w_dw"], params["b_dw"]        # (Cin,1,3,3), (Cin,)
    w_pw, b_pw = params["w_pw"], params["b_pw"]        # (Cout,Cin,1,1), (Cout,)
    gamma, beta = params["gamma"], params["beta"]      # (Cout,), (Cout,)
    mean, var = params["mean"], params["var"]          # (Cout,), (Cout,)

    N, Cin, H, W = x_nchw.shape
    Cout = w_pw.shape[0]
    Hp, Wp = H + 2, W + 2
    Sout = Hp * Wp

    # Images per grid step: largest divisor of N <= cap, preferring blocks whose
    # sublane dims (Nb*Cin, Nb*Cout) are multiples of 8 (or full-array blocks).
    cap = max(1, min(N, max_images_per_step))
    divisors = [d for d in range(1, cap + 1) if N % d == 0]
    good = [d for d in divisors
            if d == N or ((d * Cin) % 8 == 0 and (d * Cout) % 8 == 0)]
    Nb = max(good) if good else max(divisors)
    grid = (N // Nb,)

    # Pre-pad W only (cheap XLA pad on a tiny tensor); the top/bottom pad rows and the
    # frame margins are produced inside the kernel, never materialized in HBM.
    x_padw = jnp.pad(x_nchw.astype(jnp.float32), ((0, 0), (0, 0), (0, 0), (1, 1)))
    x_flat = x_padw.reshape(N * Cin, H * Wp)           # contiguous -> free reshape

    # Parameter prep (tiny, done once).
    scale = (gamma / jnp.sqrt(var + eps)).astype(jnp.float32)
    wdw_k = jnp.tile(w_dw[:, 0].reshape(Cin, 9).astype(jnp.float32), (Nb, 1))
    bdw_k = jnp.tile(b_dw.reshape(Cin, 1).astype(jnp.float32), (Nb, 1))
    wps_k = w_pw[:, :, 0, 0].astype(jnp.float32) * scale[:, None]   # BN scale folded
    b_k = ((b_pw - mean) * scale + beta).astype(jnp.float32).reshape(Cout, 1)

    # Interior mask of the flat padded output frame (hoisted out of the kernel).
    idx = jnp.arange(Sout)
    r, c = idx // Wp, idx % Wp
    m_k = ((r >= 1) & (r <= H) & (c >= 1) & (c <= W)).astype(jnp.float32).reshape(1, Sout)

    # Frame margin: must cover the largest tap shift (Wp+1) and is chosen so the slab
    # copy destination offset (off + Wp) is a multiple of 128 (lane-aligned store).
    off = -(-(2 * Wp + 1) // 128) * 128 - Wp
    assert off >= Wp + 1 and (off + Wp) % 128 == 0

    kernel = functools.partial(_dw_pw_bn_relu_kernel, Nb=Nb, Cin=Cin, Cout=Cout,
                               H=H, W=W, off=off)

    out_flat = pl.pallas_call(
        kernel,
        out_shape=jax.ShapeDtypeStruct((N * Cout, Sout), out_dtype),
        grid=grid,
        in_specs=[
            pl.BlockSpec((Nb * Cin, H * Wp), lambda i: (i, 0)),
            pl.BlockSpec((Nb * Cin, 9), lambda i: (0, 0)),
            pl.BlockSpec((Nb * Cin, 1), lambda i: (0, 0)),
            pl.BlockSpec((Cout, Cin), lambda i: (0, 0)),
            pl.BlockSpec((Cout, 1), lambda i: (0, 0)),
            pl.BlockSpec((1, Sout), lambda i: (0, 0)),
        ],
        out_specs=pl.BlockSpec((Nb * Cout, Sout), lambda i: (i, 0)),
        scratch_shapes=[pltpu.VMEM((Nb * Cin, off + Sout + off), jnp.float32)],
        compiler_params=pltpu.CompilerParams(
            dimension_semantics=("parallel",),
            vmem_limit_bytes=32 * 1024 * 1024,   # fits comfortably even on v7x (64 MiB)
        ),
    )(x_flat, wdw_k, bdw_k, wps_k, b_k, m_k)

    # Free reshape back to NCHW (N, Cout, H+2, W+2).
    return out_flat.reshape(N, Cout, Hp, Wp)


def reference(x_nchw, params, eps=1e-5):
    """Pure-JAX reference (lax conv, f32-exact) matching the PyTorch module in eval mode."""
    Cin = x_nchw.shape[1]
    dn1 = lax.conv_dimension_numbers(x_nchw.shape, params["w_dw"].shape,
                                     ("NCHW", "OIHW", "NCHW"))
    dw = lax.conv_general_dilated(x_nchw, params["w_dw"], (1, 1), ((1, 1), (1, 1)),
                                  dimension_numbers=dn1, feature_group_count=Cin,
                                  precision=lax.Precision.HIGHEST)
    dw = dw + params["b_dw"][None, :, None, None]
    dn2 = lax.conv_dimension_numbers(dw.shape, params["w_pw"].shape,
                                     ("NCHW", "OIHW", "NCHW"))
    pw = lax.conv_general_dilated(dw, params["w_pw"], (1, 1), ((1, 1), (1, 1)),
                                  dimension_numbers=dn2,
                                  precision=lax.Precision.HIGHEST)
    pw = pw + params["b_pw"][None, :, None, None]
    s = params["gamma"] / jnp.sqrt(params["var"] + eps)
    y = (pw - params["mean"][None, :, None, None]) * s[None, :, None, None] \
        + params["beta"][None, :, None, None]
    return jnp.maximum(y, 0.0)


if __name__ == "__main__":
    key = jax.random.PRNGKey(0)
    N, Cin, Cout, H, W = 2, 4, 8, 16, 16

    ks = jax.random.split(key, 8)
    x = jax.random.normal(ks[0], (N, Cin, H, W), jnp.float32)
    params = {
        "w_dw": jax.random.normal(ks[1], (Cin, 1, 3, 3), jnp.float32) * 0.2,
        "b_dw": jax.random.normal(ks[2], (Cin,), jnp.float32) * 0.1,
        "w_pw": jax.random.normal(ks[3], (Cout, Cin, 1, 1), jnp.float32) * 0.2,
        "b_pw": jax.random.normal(ks[4], (Cout,), jnp.float32) * 0.1,
        "gamma": 1.0 + 0.1 * jax.random.normal(ks[5], (Cout,), jnp.float32),
        "beta": 0.1 * jax.random.normal(ks[6], (Cout,), jnp.float32),
        "mean": 0.1 * jax.random.normal(ks[7], (Cout,), jnp.float32),
        "var": jnp.linspace(0.5, 1.5, Cout, dtype=jnp.float32),
    }

    out = jax.block_until_ready(depth_wise_conv(x, params))
    ref = jax.block_until_ready(reference(x, params))

    assert out.shape == (N, Cout, H + 2, W + 2), out.shape
    # All kernel math is f32 now (bf16 MXU path removed) -> tight tolerance restored.
    assert jnp.allclose(out, ref, atol=1e-5, rtol=1e-5), \
        f"max abs err {jnp.max(jnp.abs(out - ref))}"
    print("KERNEL_OK")
</pallas_src>

<mosaic_0001>
module attributes {stable_mosaic.version = 11 : i64} {
  func.func @_dw_pw_bn_relu_kernel(%arg0: i32, %arg1: memref<8x288xf32, #tpu.memory_space<vmem>>, %arg2: memref<8x9xf32, #tpu.memory_space<vmem>>, %arg3: memref<8x1xf32, #tpu.memory_space<vmem>>, %arg4: memref<8x4xf32, #tpu.memory_space<vmem>>, %arg5: memref<8x1xf32, #tpu.memory_space<vmem>>, %arg6: memref<1x324xf32, #tpu.memory_space<vmem>>, %arg7: memref<16x324xf32, #tpu.memory_space<vmem>>, %arg8: memref<8x544xf32, #tpu.memory_space<vmem>>) attributes {dimension_semantics = [#tpu.dimension_semantics<parallel>], iteration_bounds = array<i64: 1>, scalar_prefetch = 0 : i64, scratch_operands = 1 : i64, tpu.core_type = #tpu.core_type<tc>, window_params = [{transform_indices = @transform_0, window_bounds = array<i64: 8, 288>}, {pipeline_mode = #tpu.pipeline_mode<synchronous>, transform_indices = @transform_1, window_bounds = array<i64: 8, 9>}, {pipeline_mode = #tpu.pipeline_mode<synchronous>, transform_indices = @transform_2, window_bounds = array<i64: 8, 1>}, {pipeline_mode = #tpu.pipeline_mode<synchronous>, transform_indices = @transform_3, window_bounds = array<i64: 8, 4>}, {pipeline_mode = #tpu.pipeline_mode<synchronous>, transform_indices = @transform_4, window_bounds = array<i64: 8, 1>}, {pipeline_mode = #tpu.pipeline_mode<synchronous>, transform_indices = @transform_5, window_bounds = array<i64: 1, 324>}, {transform_indices = @transform_6, window_bounds = array<i64: 16, 324>}]} {
    %cst = arith.constant 0.000000e+00 : f32
    %0 = vector.broadcast %cst : f32 to vector<8x128xf32>
    %c0 = arith.constant 0 : index
    %c0_0 = arith.constant 0 : index
    %1 = vector.load %arg8[%c0, %c0_0] : memref<8x544xf32, #tpu.memory_space<vmem>>, vector<8x128xf32>
    tpu.vector_store %arg8[%c0, %c0_0], %0 {strides = array<i32>} : memref<8x544xf32, #tpu.memory_space<vmem>>, vector<8x128xf32>,
    %c0_1 = arith.constant 0 : index
    %c416 = arith.constant 416 : index
    %2 = vector.load %arg8[%c0_1, %c416] : memref<8x544xf32, #tpu.memory_space<vmem>>, vector<8x128xf32>
    tpu.vector_store %arg8[%c0_1, %c416], %0 {strides = array<i32>} : memref<8x544xf32, #tpu.memory_space<vmem>>, vector<8x128xf32>,
    %c0_2 = arith.constant 0 : index
    %c0_3 = arith.constant 0 : index
    %3 = vector.load %arg1[%c0_2, %c0_3] : memref<8x288xf32, #tpu.memory_space<vmem>>, vector<8x288xf32>
    %c0_4 = arith.constant 0 : index
    %c128 = arith.constant 128 : index
    %4 = vector.load %arg8[%c0_4, %c128] : memref<8x544xf32, #tpu.memory_space<vmem>>, vector<8x288xf32>
    tpu.vector_store %arg8[%c0_4, %c128], %3 {strides = array<i32>} : memref<8x544xf32, #tpu.memory_space<vmem>>, vector<8x288xf32>,
    %c0_5 = arith.constant 0 : index
    %c0_6 = arith.constant 0 : index
    %5 = vector.load %arg2[%c0_5, %c0_6] : memref<8x9xf32, #tpu.memory_space<vmem>>, vector<8x9xf32>
    %c0_7 = arith.constant 0 : index
    %c91 = arith.constant 91 : index
    %6 = vector.load %arg8[%c0_7, %c91] : memref<8x544xf32, #tpu.memory_space<vmem>>, vector<8x324xf32>
    %7 = vector.extract_strided_slice %5 {offsets = [0, 0], sizes = [8, 1], strides = [1, 1]} : vector<8x9xf32> to vector<8x1xf32>
    %8 = vector.broadcast %7 : vector<8x1xf32> to vector<8x324xf32>
    %9 = arith.mulf %8, %6 : vector<8x324xf32>
    %c0_8 = arith.constant 0 : index
    %c92 = arith.constant 92 : index
    %10 = vector.load %arg8[%c0_8, %c92] : memref<8x544xf32, #tpu.memory_space<vmem>>, vector<8x324xf32>
    %11 = vector.extract_strided_slice %5 {offsets = [0, 1], sizes = [8, 1], strides = [1, 1]} : vector<8x9xf32> to vector<8x1xf32>
    %12 = vector.broadcast %11 : vector<8x1xf32> to vector<8x324xf32>
    %13 = arith.mulf %12, %10 : vector<8x324xf32>
    %14 = arith.addf %9, %13 : vector<8x324xf32>
    %c0_9 = arith.constant 0 : index
    %c93 = arith.constant 93 : index
    %15 = vector.load %arg8[%c0_9, %c93] : memref<8x544xf32, #tpu.memory_space<vmem>>, vector<8x324xf32>
    %16 = vector.extract_strided_slice %5 {offsets = [0, 2], sizes = [8, 1], strides = [1, 1]} : vector<8x9xf32> to vector<8x1xf32>
    %17 = vector.broadcast %16 : vector<8x1xf32> to vector<8x324xf32>
    %18 = arith.mulf %17, %15 : vector<8x324xf32>
    %19 = arith.addf %14, %18 : vector<8x324xf32>
    %c0_10 = arith.constant 0 : index
    %c109 = arith.constant 109 : index
    %20 = vector.load %arg8[%c0_10, %c109] : memref<8x544xf32, #tpu.memory_space<vmem>>, vector<8x324xf32>
    %21 = vector.extract_strided_slice %5 {offsets = [0, 3], sizes = [8, 1], strides = [1, 1]} : vector<8x9xf32> to vector<8x1xf32>
    %22 = vector.broadcast %21 : vector<8x1xf32> to vector<8x324xf32>
    %23 = arith.mulf %22, %20 : vector<8x324xf32>
    %24 = arith.addf %19, %23 : vector<8x324xf32>
    %c0_11 = arith.constant 0 : index
    %c110 = arith.constant 110 : index
    %25 = vector.load %arg8[%c0_11, %c110] : memref<8x544xf32, #tpu.memory_space<vmem>>, vector<8x324xf32>
    %26 = vector.extract_strided_slice %5 {offsets = [0, 4], sizes = [8, 1], strides = [1, 1]} : vector<8x9xf32> to vector<8x1xf32>
    %27 = vector.broadcast %26 : vector<8x1xf32> to vector<8x324xf32>
    %28 = arith.mulf %27, %25 : vector<8x324xf32>
    %29 = arith.addf %24, %28 : vector<8x324xf32>
    %c0_12 = arith.constant 0 : index
    %c111 = arith.constant 111 : index
    %30 = vector.load %arg8[%c0_12, %c111] : memref<8x544xf32, #tpu.memory_space<vmem>>, vector<8x324xf32>
    %31 = vector.extract_strided_slice %5 {offsets = [0, 5], sizes = [8, 1], strides = [1, 1]} : vector<8x9xf32> to vector<8x1xf32>
    %32 = vector.broadcast %31 : vector<8x1xf32> to vector<8x324xf32>
    %33 = arith.mulf %32, %30 : vector<8x324xf32>
    %34 = arith.addf %29, %33 : vector<8x324xf32>
    %c0_13 = arith.constant 0 : index
    %c127 = arith.constant 127 : index
    %35 = vector.load %arg8[%c0_13, %c127] : memref<8x544xf32, #tpu.memory_space<vmem>>, vector<8x324xf32>
    %36 = vector.extract_strided_slice %5 {offsets = [0, 6], sizes = [8, 1], strides = [1, 1]} : vector<8x9xf32> to vector<8x1xf32>
    %37 = vector.broadcast %36 : vector<8x1xf32> to vector<8x324xf32>
    %38 = arith.mulf %37, %35 : vector<8x324xf32>
    %39 = arith.addf %34, %38 : vector<8x324xf32>
    %c0_14 = arith.constant 0 : index
    %c128_15 = arith.constant 128 : index
    %40 = vector.load %arg8[%c0_14, %c128_15] : memref<8x544xf32, #tpu.memory_space<vmem>>, vector<8x324xf32>
    %41 = vector.extract_strided_slice %5 {offsets = [0, 7], sizes = [8, 1], strides = [1, 1]} : vector<8x9xf32> to vector<8x1xf32>
    %42 = vector.broadcast %41 : vector<8x1xf32> to vector<8x324xf32>
    %43 = arith.mulf %42, %40 : vector<8x324xf32>
    %44 = arith.addf %39, %43 : vector<8x324xf32>
    %c0_16 = arith.constant 0 : index
    %c129 = arith.constant 129 : index
    %45 = vector.load %arg8[%c0_16, %c129] : memref<8x544xf32, #tpu.memory_space<vmem>>, vector<8x324xf32>
    %46 = vector.extract_strided_slice %5 {offsets = [0, 8], sizes = [8, 1], strides = [1, 1]} : vector<8x9xf32> to vector<8x1xf32>
    %47 = vector.broadcast %46 : vector<8x1xf32> to vector<8x324xf32>
    %48 = arith.mulf %47, %45 : vector<8x324xf32>
    %49 = arith.addf %44, %48 : vector<8x324xf32>
    %c0_17 = arith.constant 0 : index
    %c0_18 = arith.constant 0 : index
    %50 = vector.load %arg3[%c0_17, %c0_18] : memref<8x1xf32, #tpu.memory_space<vmem>>, vector<8x1xf32>
    %51 = vector.broadcast %50 : vector<8x1xf32> to vector<8x324xf32>
    %52 = arith.addf %49, %51 : vector<8x324xf32>
    %c0_19 = arith.constant 0 : index
    %c0_20 = arith.constant 0 : index
    %53 = vector.load %arg6[%c0_19, %c0_20] : memref<1x324xf32, #tpu.memory_space<vmem>>, vector<1x324xf32>
    %54 = vector.broadcast %53 : vector<1x324xf32> to vector<8x324xf32>
    %55 = arith.mulf %52, %54 : vector<8x324xf32>
    %c0_21 = arith.constant 0 : index
    %c0_22 = arith.constant 0 : index
    %56 = vector.load %arg4[%c0_21, %c0_22] : memref<8x4xf32, #tpu.memory_space<vmem>>, vector<8x4xf32>
    %57 = vector.extract_strided_slice %56 {offsets = [0, 0], sizes = [8, 1], strides = [1, 1]} : vector<8x4xf32> to vector<8x1xf32>
    %58 = vector.extract_strided_slice %56 {offsets = [0, 1], sizes = [8, 1], strides = [1, 1]} : vector<8x4xf32> to vector<8x1xf32>
    %59 = vector.extract_strided_slice %56 {offsets = [0, 2], sizes = [8, 1], strides = [1, 1]} : vector<8x4xf32> to vector<8x1xf32>
    %60 = vector.extract_strided_slice %56 {offsets = [0, 3], sizes = [8, 1], strides = [1, 1]} : vector<8x4xf32> to vector<8x1xf32>
    %c0_23 = arith.constant 0 : index
    %c0_24 = arith.constant 0 : index
    %61 = vector.load %arg5[%c0_23, %c0_24] : memref<8x1xf32, #tpu.memory_space<vmem>>, vector<8x1xf32>
    %62 = vector.extract_strided_slice %55 {offsets = [0, 0], sizes = [1, 324], strides = [1, 1]} : vector<8x324xf32> to vector<1x324xf32>
    %63 = vector.broadcast %57 : vector<8x1xf32> to vector<8x324xf32>
    %64 = vector.broadcast %62 : vector<1x324xf32> to vector<8x324xf32>
    %65 = arith.mulf %63, %64 : vector<8x324xf32>
    %66 = vector.extract_strided_slice %55 {offsets = [1, 0], sizes = [1, 324], strides = [1, 1]} : vector<8x324xf32> to vector<1x324xf32>
    %67 = vector.broadcast %58 : vector<8x1xf32> to vector<8x324xf32>
    %68 = vector.broadcast %66 : vector<1x324xf32> to vector<8x324xf32>
    %69 = arith.mulf %67, %68 : vector<8x324xf32>
    %70 = arith.addf %65, %69 : vector<8x324xf32>
    %71 = vector.extract_strided_slice %55 {offsets = [2, 0], sizes = [1, 324], strides = [1, 1]} : vector<8x324xf32> to vector<1x324xf32>
    %72 = vector.broadcast %59 : vector<8x1xf32> to vector<8x324xf32>
    %73 = vector.broadcast %71 : vector<1x324xf32> to vector<8x324xf32>
    %74 = arith.mulf %72, %73 : vector<8x324xf32>
    %75 = arith.addf %70, %74 : vector<8x324xf32>
    %76 = vector.extract_strided_slice %55 {offsets = [3, 0], sizes = [1, 324], strides = [1, 1]} : vector<8x324xf32> to vector<1x324xf32>
    %77 = vector.broadcast %60 : vector<8x1xf32> to vector<8x324xf32>
    %78 = vector.broadcast %76 : vector<1x324xf32> to vector<8x324xf32>
    %79 = arith.mulf %77, %78 : vector<8x324xf32>
    %80 = arith.addf %75, %79 : vector<8x324xf32>
    %81 = vector.broadcast %61 : vector<8x1xf32> to vector<8x324xf32>
    %82 = arith.addf %80, %81 : vector<8x324xf32>
    %cst_25 = arith.constant 0.000000e+00 : f32
    %83 = vector.broadcast %cst_25 : f32 to vector<8x324xf32>
    %84 = arith.maximumf %82, %83 : vector<8x324xf32>
    %c0_26 = arith.constant 0 : index
    %c0_27 = arith.constant 0 : index
    %85 = vector.load %arg7[%c0_26, %c0_27] : memref<16x324xf32, #tpu.memory_space<vmem>>, vector<8x324xf32>
    tpu.vector_store %arg7[%c0_26, %c0_27], %84 {strides = array<i32>} : memref<16x324xf32, #tpu.memory_space<vmem>>, vector<8x324xf32>,
    %86 = vector.extract_strided_slice %55 {offsets = [4, 0], sizes = [1, 324], strides = [1, 1]} : vector<8x324xf32> to vector<1x324xf32>
    %87 = vector.broadcast %57 : vector<8x1xf32> to vector<8x324xf32>
    %88 = vector.broadcast %86 : vector<1x324xf32> to vector<8x324xf32>
    %89 = arith.mulf %87, %88 : vector<8x324xf32>
    %90 = vector.extract_strided_slice %55 {offsets = [5, 0], sizes = [1, 324], strides = [1, 1]} : vector<8x324xf32> to vector<1x324xf32>
    %91 = vector.broadcast %58 : vector<8x1xf32> to vector<8x324xf32>
    %92 = vector.broadcast %90 : vector<1x324xf32> to vector<8x324xf32>
    %93 = arith.mulf %91, %92 : vector<8x324xf32>
    %94 = arith.addf %89, %93 : vector<8x324xf32>
    %95 = vector.extract_strided_slice %55 {offsets = [6, 0], sizes = [1, 324], strides = [1, 1]} : vector<8x324xf32> to vector<1x324xf32>
    %96 = vector.broadcast %59 : vector<8x1xf32> to vector<8x324xf32>
    %97 = vector.broadcast %95 : vector<1x324xf32> to vector<8x324xf32>
    %98 = arith.mulf %96, %97 : vector<8x324xf32>
    %99 = arith.addf %94, %98 : vector<8x324xf32>
    %100 = vector.extract_strided_slice %55 {offsets = [7, 0], sizes = [1, 324], strides = [1, 1]} : vector<8x324xf32> to vector<1x324xf32>
    %101 = vector.broadcast %60 : vector<8x1xf32> to vector<8x324xf32>
    %102 = vector.broadcast %100 : vector<1x324xf32> to vector<8x324xf32>
    %103 = arith.mulf %101, %102 : vector<8x324xf32>
    %104 = arith.addf %99, %103 : vector<8x324xf32>
    %105 = vector.broadcast %61 : vector<8x1xf32> to vector<8x324xf32>
    %106 = arith.addf %104, %105 : vector<8x324xf32>
    %cst_28 = arith.constant 0.000000e+00 : f32
    %107 = vector.broadcast %cst_28 : f32 to vector<8x324xf32>
    %108 = arith.maximumf %106, %107 : vector<8x324xf32>
    %c8 = arith.constant 8 : index
    %c0_29 = arith.constant 0 : index
    %109 = vector.load %arg7[%c8, %c0_29] : memref<16x324xf32, #tpu.memory_space<vmem>>, vector<8x324xf32>
    tpu.vector_store %arg7[%c8, %c0_29], %108 {strides = array<i32>} : memref<16x324xf32, #tpu.memory_space<vmem>>, vector<8x324xf32>,
    return
  }
  func.func @transform_0(%arg0: i32) -> (i32, i32) {
    %c0_i32 = arith.constant 0 : i32
    %c0_i32_0 = arith.constant 0 : i32
    return %arg0, %c0_i32 : i32, i32
  }
  func.func @transform_1(%arg0: i32) -> (i32, i32) {
    %c0_i32 = arith.constant 0 : i32
    %c0_i32_0 = arith.constant 0 : i32
    %c0_i32_1 = arith.constant 0 : i32
    return %c0_i32, %c0_i32_0 : i32, i32
  }
  func.func @transform_2(%arg0: i32) -> (i32, i32) {
    %c0_i32 = arith.constant 0 : i32
    %c0_i32_0 = arith.constant 0 : i32
    %c0_i32_1 = arith.constant 0 : i32
    return %c0_i32, %c0_i32_0 : i32, i32
  }
  func.func @transform_3(%arg0: i32) -> (i32, i32) {
    %c0_i32 = arith.constant 0 : i32
    %c0_i32_0 = arith.constant 0 : i32
    %c0_i32_1 = arith.constant 0 : i32
    return %c0_i32, %c0_i32_0 : i32, i32
  }
  func.func @transform_4(%arg0: i32) -> (i32, i32) {
    %c0_i32 = arith.constant 0 : i32
    %c0_i32_0 = arith.constant 0 : i32
    %c0_i32_1 = arith.constant 0 : i32
    return %c0_i32, %c0_i32_0 : i32, i32
  }
  func.func @transform_5(%arg0: i32) -> (i32, i32) {
    %c0_i32 = arith.constant 0 : i32
    %c0_i32_0 = arith.constant 0 : i32
    %c0_i32_1 = arith.constant 0 : i32
    return %c0_i32, %c0_i32_0 : i32, i32
  }
  func.func @transform_6(%arg0: i32) -> (i32, i32) {
    %c0_i32 = arith.constant 0 : i32
    %c0_i32_0 = arith.constant 0 : i32
    return %arg0, %c0_i32 : i32, i32
  }
}

</mosaic_0001>

<llo_original>
// kernel: tpu_custom_call.1
$region0: #{tpu_custom_call.1}
  #allocation0 [shape = 'u32[]', space=smem, size = 0x4, offset = 0x4, fixed_abs, tag = 'smem constant byte address 0x4 - core index']
  #allocation1 [shape = 'u32[144,128]{1,0:T(1,128)}', space=vmem, size = 0x12000, scoped, tag = 'internal scratch']
  #allocation2 [shape = 'f32[8,544]{1,0:T(8,128)}', space=vmem, size = 0x5000, scoped, tag = 'scratch operand']
  %s0 = inlined_call_operand.vmem [shape: f32[8,288], index: 0, kind: input, shape index: {}]
  %s1 = inlined_call_operand.vmem [shape: f32[8,9], index: 1, kind: input, shape index: {}]
  %s2 = inlined_call_operand.vmem [shape: f32[8,1], index: 2, kind: input, shape index: {}]
  %s3 = inlined_call_operand.vmem [shape: f32[8,4], index: 3, kind: input, shape index: {}]
  %s4 = inlined_call_operand.vmem [shape: f32[8,1], index: 4, kind: input, shape index: {}]
  %s5 = inlined_call_operand.vmem [shape: f32[1,324], index: 5, kind: input, shape index: {}]
  %s6 = inlined_call_operand.hbm [shape: f32[16,324], index: 6, kind: output, shape index: {}]
  %s7 = sld [smem:[#allocation0]]
  $region34: #{tpu_custom_call.1} parent=0
    _
  %s9 = ssub.s32 1, %s7
  %s10 = scalar_select 0, %s9, %s7
  $region1: #{tpu_custom_call.1} parent=0
    #allocation3 [shape = 'u8[24576]{0}', space=vmem, size = 0x6000, scoped, tag = 'output window, operand 0, single buffered']
    #allocation4 [shape = 's32[1]{0}', space=sflag, size = 0x4, scoped, tag = 'scoped memory for tpu_custom_call.1']
    %11 = vsyncpa [#allocation4], 0
    // Predicated region
    $region2: #{tpu_custom_call.1} parent=1 // pred_check
      _
    $region3: #{tpu_custom_call.1} parent=1 // pred_check_branch
      %13 = sbr.rel (0) target = $region5
    $region4: #{tpu_custom_call.1} parent=1 // pred_region
      _
    $region5: #{tpu_custom_call.1} parent=1 // pred_fallthru
      _
    // Predicated region
    $region6: #{tpu_custom_call.1} parent=1 // pred_check
      _
    $region7: #{tpu_custom_call.1} parent=1 // pred_check_branch
      %15 = sbr.rel (0) target = $region9
    $region8: #{tpu_custom_call.1} parent=1 // pred_region
      _
    $region9: #{tpu_custom_call.1} parent=1 // pred_fallthru
      _
    // Predicated region
    $region10: #{tpu_custom_call.1} parent=1 // pred_check
      _
    $region11: #{tpu_custom_call.1} parent=1 // pred_check_branch
      %17 = sbr.rel (0) target = $region13
    $region12: #{tpu_custom_call.1} parent=1 // pred_region
      _
    $region13: #{tpu_custom_call.1} parent=1 // pred_fallthru
      _
    // Predicated region
    $region14: #{tpu_custom_call.1} parent=1 // pred_check
      _
    $region15: #{tpu_custom_call.1} parent=1 // pred_check_branch
      %19 = sbr.rel (0) target = $region17
    $region16: #{tpu_custom_call.1} parent=1 // pred_region
      _
    $region17: #{tpu_custom_call.1} parent=1 // pred_fallthru
      _
    // Predicated region
    $region18: #{tpu_custom_call.1} parent=1 // pred_check
      _
    $region19: #{tpu_custom_call.1} parent=1 // pred_check_branch
      %21 = sbr.rel (0) target = $region21
    $region20: #{tpu_custom_call.1} parent=1 // pred_region
      _
    $region21: #{tpu_custom_call.1} parent=1 // pred_fallthru
      _
    // Predicated region
    $region22: #{tpu_custom_call.1} parent=1 // pred_check
      _
    $region23: #{tpu_custom_call.1} parent=1 // pred_check_branch
      %23 = sbr.rel (0) target = $region25
    $region24: #{tpu_custom_call.1} parent=1 // pred_region
      _
    $region25: #{tpu_custom_call.1} parent=1 // pred_fallthru
      _
    %24 = vst [vmem:[#allocation2] sm:$0xff] 0.0
    %vm25 = vcmask 1047808
    %26 = vst.msk [vmem:[#allocation2 + $0x18] sm:$0xff] %vm25, 0.0
    %vm27 = vcmask 261120
    %28 = vst.msk [vmem:[#allocation2 + $0x20] sm:$0xff] %vm27, 0.0
    %v29 = vld [vmem:[%s0] sm:$0xff]
    %v30 = vld [vmem:[%s0 + $0x8] sm:$0xff]
    %v31 = vld [vmem:[%s0 + $0x10] sm:$0xff]
    %32 = vst [vmem:[#allocation2 + $0x8] sm:$0xff] %v29
    %33 = vst [vmem:[#allocation2 + $0x10] sm:$0xff] %v30
    %34 = vst.msk [vmem:[#allocation2 + $0x18] sm:$0xff] %vm27, %v31
    %v35 = vld [vmem:[%s1] sm:$0xff]
    %v36 = vld [vmem:[#allocation2] sm:$0xff]
    %v37 = vld [vmem:[#allocation2 + $0x8] sm:$0xff]
    %v38 = vld [vmem:[#allocation2 + $0x10] sm:$0xff]
    %v39 = vld [vmem:[#allocation2 + $0x18] sm:$0xff]
    %41 = vset.pattern.permute.xlu0 0
    %42 = vperm.xlu0 %41, %v35
    %v43 = vpop.permute.xlu0 %42
    %v45 = vmul.f32 %v43, %v36
    %v46 = vmul.f32 %v43, %v37
    %v47 = vmul.f32 %v43, %v38
    %v48 = vmul.f32 %v43, %v39
    %49 = vset.pattern.permute.xlu0 1
    %50 = vperm.xlu0 %49, %v35
    %v51 = vpop.permute.xlu0 %50
    %v53 = vmul.f32 %v51, %v36
    %v54 = vmul.f32 %v51, %v37
    %v55 = vmul.f32 %v51, %v38
    %v56 = vmul.f32 %v51, %v39
    %61 = vrot.lane.b32.xlu0 %v53, 127
    %v62 = vpop.permute.xlu0 %61
    %63 = vrot.lane.b32.xlu0 %v54, 127
    %v64 = vpop.permute.xlu0 %63
    %65 = vrot.lane.b32.xlu0 %v55, 127
    %v66 = vpop.permute.xlu0 %65
    %67 = vrot.lane.b32.xlu0 %v56, 127
    %v68 = vpop.permute.xlu0 %67
    %vm69 = vcmask 1039360
    %v70 = vsel %vm69, %v62, %v64
    %v71 = vsel %vm69, %v64, %v66
    %v72 = vsel %vm69, %v66, %v68
    %v77 = vadd.f32 %v45, %v70
    %v78 = vadd.f32 %v46, %v71
    %v79 = vadd.f32 %v47, %v72
    %v80 = vadd.f32 %v48, %v68
    %81 = vset.pattern.permute.xlu0 2
    %82 = vperm.xlu0 %81, %v35
    %v83 = vpop.permute.xlu0 %82
    %v85 = vmul.f32 %v83, %v36
    %v86 = vmul.f32 %v83, %v37
    %v87 = vmul.f32 %v83, %v38
    %v88 = vmul.f32 %v83, %v39
    %93 = vrot.lane.b32.xlu0 %v85, 126
    %v94 = vpop.permute.xlu0 %93
    %95 = vrot.lane.b32.xlu0 %v86, 126
    %v96 = vpop.permute.xlu0 %95
    %97 = vrot.lane.b32.xlu0 %v87, 126
    %v98 = vpop.permute.xlu0 %97
    %99 = vrot.lane.b32.xlu0 %v88, 126
    %v100 = vpop.permute.xlu0 %99
    %vm101 = vcmask 1031168
    %v102 = vsel %vm101, %v94, %v96
    %v103 = vsel %vm101, %v96, %v98
    %v104 = vsel %vm101, %v98, %v100
    %v109 = vadd.f32 %v77, %v102
    %v110 = vadd.f32 %v78, %v103
    %v111 = vadd.f32 %v79, %v104
    %v112 = vadd.f32 %v80, %v100
    %113 = vset.pattern.permute.xlu0 3
    %114 = vperm.xlu0 %113, %v35
    %v115 = vpop.permute.xlu0 %114
    %v117 = vmul.f32 %v115, %v36
    %v118 = vmul.f32 %v115, %v37
    %v119 = vmul.f32 %v115, %v38
    %v120 = vmul.f32 %v115, %v39
    %125 = vrot.lane.b32.xlu0 %v117, 110
    %v126 = vpop.permute.xlu0 %125
    %127 = vrot.lane.b32.xlu0 %v118, 110
    %v128 = vpop.permute.xlu0 %127
    %129 = vrot.lane.b32.xlu0 %v119, 110
    %v130 = vpop.permute.xlu0 %129
    %131 = vrot.lane.b32.xlu0 %v120, 110
    %v132 = vpop.permute.xlu0 %131
    %vm133 = vcmask 900096
    %v134 = vsel %vm133, %v126, %v128
    %v135 = vsel %vm133, %v128, %v130
    %v136 = vsel %vm133, %v130, %v132
    %v141 = vadd.f32 %v109, %v134
    %v142 = vadd.f32 %v110, %v135
    %v143 = vadd.f32 %v111, %v136
    %v144 = vadd.f32 %v112, %v132
    %145 = vset.pattern.permute.xlu0 4
    %146 = vperm.xlu0 %145, %v35
    %v147 = vpop.permute.xlu0 %146
    %v149 = vmul.f32 %v147, %v36
    %v150 = vmul.f32 %v147, %v37
    %v151 = vmul.f32 %v147, %v38
    %v152 = vmul.f32 %v147, %v39
    %157 = vrot.lane.b32.xlu0 %v149, 109
    %v158 = vpop.permute.xlu0 %157
    %159 = vrot.lane.b32.xlu0 %v150, 109
    %v160 = vpop.permute.xlu0 %159
    %161 = vrot.lane.b32.xlu0 %v151, 109
    %v162 = vpop.permute.xlu0 %161
    %163 = vrot.lane.b32.xlu0 %v152, 109
    %v164 = vpop.permute.xlu0 %163
    %vm165 = vcmask 891904
    %v166 = vsel %vm165, %v158, %v160
    %v167 = vsel %vm165, %v160, %v162
    %v168 = vsel %vm165, %v162, %v164
    %v173 = vadd.f32 %v141, %v166
    %v174 = vadd.f32 %v142, %v167
    %v175 = vadd.f32 %v143, %v168
    %v176 = vadd.f32 %v144, %v164
    %177 = vset.pattern.permute.xlu0 5
    %178 = vperm.xlu0 %177, %v35
    %v179 = vpop.permute.xlu0 %178
    %v181 = vmul.f32 %v179, %v36
    %v182 = vmul.f32 %v179, %v37
    %v183 = vmul.f32 %v179, %v38
    %v184 = vmul.f32 %v179, %v39
    %189 = vrot.lane.b32.xlu0 %v181, 108
    %v190 = vpop.permute.xlu0 %189
    %191 = vrot.lane.b32.xlu0 %v182, 108
    %v192 = vpop.permute.xlu0 %191
    %193 = vrot.lane.b32.xlu0 %v183, 108
    %v194 = vpop.permute.xlu0 %193
    %195 = vrot.lane.b32.xlu0 %v184, 108
    %v196 = vpop.permute.xlu0 %195
    %vm197 = vcmask 883712
    %v198 = vsel %vm197, %v190, %v192
    %v199 = vsel %vm197, %v192, %v194
    %v200 = vsel %vm197, %v194, %v196
    %v205 = vadd.f32 %v173, %v198
    %v206 = vadd.f32 %v174, %v199
    %v207 = vadd.f32 %v175, %v200
    %v208 = vadd.f32 %v176, %v196
    %209 = vset.pattern.permute.xlu0 6
    %210 = vperm.xlu0 %209, %v35
    %v211 = vpop.permute.xlu0 %210
    %v213 = vmul.f32 %v211, %v36
    %v214 = vmul.f32 %v211, %v37
    %v215 = vmul.f32 %v211, %v38
    %v216 = vmul.f32 %v211, %v39
    %221 = vrot.lane.b32.xlu0 %v213, 92
    %v222 = vpop.permute.xlu0 %221
    %223 = vrot.lane.b32.xlu0 %v214, 92
    %v224 = vpop.permute.xlu0 %223
    %225 = vrot.lane.b32.xlu0 %v215, 92
    %v226 = vpop.permute.xlu0 %225
    %227 = vrot.lane.b32.xlu0 %v216, 92
    %v228 = vpop.permute.xlu0 %227
    %vm229 = vcmask 752640
    %v230 = vsel %vm229, %v222, %v224
    %v231 = vsel %vm229, %v224, %v226
    %v232 = vsel %vm229, %v226, %v228
    %v237 = vadd.f32 %v205, %v230
    %v238 = vadd.f32 %v206, %v231
    %v239 = vadd.f32 %v207, %v232
    %v240 = vadd.f32 %v208, %v228
    %241 = vset.pattern.permute.xlu0 7
    %242 = vperm.xlu0 %241, %v35
    %v243 = vpop.permute.xlu0 %242
    %v245 = vmul.f32 %v243, %v37
    %v246 = vmul.f32 %v243, %v38
    %v247 = vmul.f32 %v243, %v39
    %251 = vrot.lane.b32.xlu0 %v245, 91
    %v252 = vpop.permute.xlu0 %251
    %253 = vrot.lane.b32.xlu0 %v246, 91
    %v254 = vpop.permute.xlu0 %253
    %255 = vrot.lane.b32.xlu0 %v247, 91
    %v256 = vpop.permute.xlu0 %255
    %vm257 = vcmask 744448
    %v258 = vsel %vm257, %v252, %v254
    %v259 = vsel %vm257, %v254, %v256
    %v264 = vadd.f32 %v237, %v252
    %v265 = vadd.f32 %v238, %v258
    %v266 = vadd.f32 %v239, %v259
    %v267 = vadd.f32 %v240, %v256
    %268 = vset.pattern.permute.xlu0 8
    %269 = vperm.xlu0 %268, %v35
    %v270 = vpop.permute.xlu0 %269
    %v272 = vmul.f32 %v270, %v37
    %v273 = vmul.f32 %v270, %v38
    %v274 = vmul.f32 %v270, %v39
    %278 = vrot.lane.b32.xlu0 %v272, 90
    %v279 = vpop.permute.xlu0 %278
    %280 = vrot.lane.b32.xlu0 %v273, 90
    %v281 = vpop.permute.xlu0 %280
    %282 = vrot.lane.b32.xlu0 %v274, 90
    %v283 = vpop.permute.xlu0 %282
    %vm284 = vcmask 736256
    %v285 = vsel %vm284, %v279, %v281
    %v286 = vsel %vm284, %v281, %v283
    %v291 = vadd.f32 %v264, %v279
    %v292 = vadd.f32 %v265, %v285
    %v293 = vadd.f32 %v266, %v286
    %v294 = vadd.f32 %v267, %v283
    %v295 = vld [vmem:[%s2] sm:$0xff]
    %297 = vset.pattern.permute.xlu0 0
    %298 = vperm.xlu0 %297, %v295
    %v299 = vpop.permute.xlu0 %298
    %v301 = vadd.f32 %v291, %v299
    %v302 = vadd.f32 %v292, %v299
    %v303 = vadd.f32 %v293, %v299
    %v304 = vadd.f32 %v294, %v299
    %v305 = vld [vmem:[%s5] sm:$0x7]
    %v307 = vlaneseq
    %v308 = vshrl.u32 %v307, 7
    %v309 = vsub.s32 0, %v308
    %v310 = vrot.slane %v305, %v309
    %v311 = vlaneseq
    %v312 = vshrl.u32 %v311, 7
    %v313 = vsub.s32 1, %v312
    %v314 = vrot.slane %v305, %v313
    %v315 = vlaneseq
    %v316 = vshrl.u32 %v315, 7
    %v317 = vsub.s32 2, %v316
    %v318 = vrot.slane %v305, %v317
    %319 = vrot.lane.b32.xlu0 %v310, 91
    %v320 = vpop.permute.xlu0 %319
    %321 = vrot.lane.b32.xlu0 %v314, 91
    %v322 = vpop.permute.xlu0 %321
    %323 = vrot.lane.b32.xlu0 %v318, 91
    %v324 = vpop.permute.xlu0 %323
    %v325 = vsel %vm257, %v320, %v322
    %v326 = vsel %vm257, %v322, %v324
    %v331 = vmul.f32 %v301, %v320
    %v332 = vmul.f32 %v302, %v325
    %v333 = vmul.f32 %v303, %v326
    %v334 = vmul.f32 %v304, %v324
    %v335 = vld [vmem:[%s3] sm:$0xff]
    %v336 = vld [vmem:[%s4] sm:$0xff]
    %338 = vset.pattern.permute.xlu0 0
    %339 = vperm.xlu0 %338, %v335
    %v340 = vpop.permute.xlu0 %339
    %v342 = vlaneseq
    %v343 = vshrl.u32 %v342, 7
    %v344 = vsub.s32 0, %v343
    %v345 = vrot.slane %v331, %v344
    %v346 = vlaneseq
    %v347 = vshrl.u32 %v346, 7
    %v348 = vsub.s32 0, %v347
    %v349 = vrot.slane %v332, %v348
    %v350 = vlaneseq
    %v351 = vshrl.u32 %v350, 7
    %v352 = vsub.s32 0, %v351
    %v353 = vrot.slane %v333, %v352
    %v354 = vlaneseq
    %v355 = vshrl.u32 %v354, 7
    %v356 = vsub.s32 0, %v355
    %v357 = vrot.slane %v334, %v356
    %v358 = vmul.f32 %v340, %v345
    %v359 = vmul.f32 %v340, %v349
    %v360 = vmul.f32 %v340, %v353
    %v361 = vmul.f32 %v340, %v357
    %362 = vset.pattern.permute.xlu0 1
    %363 = vperm.xlu0 %362, %v335
    %v364 = vpop.permute.xlu0 %363
    %v366 = vlaneseq
    %v367 = vshrl.u32 %v366, 7
    %v368 = vsub.s32 1, %v367
    %v369 = vrot.slane %v331, %v368
    %v370 = vlaneseq
    %v371 = vshrl.u32 %v370, 7
    %v372 = vsub.s32 1, %v371
    %v373 = vrot.slane %v332, %v372
    %v374 = vlaneseq
    %v375 = vshrl.u32 %v374, 7
    %v376 = vsub.s32 1, %v375
    %v377 = vrot.slane %v333, %v376
    %v378 = vlaneseq
    %v379 = vshrl.u32 %v378, 7
    %v380 = vsub.s32 1, %v379
    %v381 = vrot.slane %v334, %v380
    %v382 = vmul.f32 %v364, %v369
    %v383 = vmul.f32 %v364, %v373
    %v384 = vmul.f32 %v364, %v377
    %v385 = vmul.f32 %v364, %v381
    %v386 = vadd.f32 %v358, %v382
    %v387 = vadd.f32 %v359, %v383
    %v388 = vadd.f32 %v360, %v384
    %v389 = vadd.f32 %v361, %v385
    %390 = vset.pattern.permute.xlu0 2
    %391 = vperm.xlu0 %390, %v335
    %v392 = vpop.permute.xlu0 %391
    %v394 = vlaneseq
    %v395 = vshrl.u32 %v394, 7
    %v396 = vsub.s32 2, %v395
    %v397 = vrot.slane %v331, %v396
    %v398 = vlaneseq
    %v399 = vshrl.u32 %v398, 7
    %v400 = vsub.s32 2, %v399
    %v401 = vrot.slane %v332, %v400
    %v402 = vlaneseq
    %v403 = vshrl.u32 %v402, 7
    %v404 = vsub.s32 2, %v403
    %v405 = vrot.slane %v333, %v404
    %v406 = vlaneseq
    %v407 = vshrl.u32 %v406, 7
    %v408 = vsub.s32 2, %v407
    %v409 = vrot.slane %v334, %v408
    %v410 = vmul.f32 %v392, %v397
    %v411 = vmul.f32 %v392, %v401
    %v412 = vmul.f32 %v392, %v405
    %v413 = vmul.f32 %v392, %v409
    %v414 = vadd.f32 %v386, %v410
    %v415 = vadd.f32 %v387, %v411
    %v416 = vadd.f32 %v388, %v412
    %v417 = vadd.f32 %v389, %v413
    %418 = vset.pattern.permute.xlu0 3
    %419 = vperm.xlu0 %418, %v335
    %v420 = vpop.permute.xlu0 %419
    %v422 = vlaneseq
    %v423 = vshrl.u32 %v422, 7
    %v424 = vsub.s32 3, %v423
    %v425 = vrot.slane %v331, %v424
    %v426 = vlaneseq
    %v427 = vshrl.u32 %v426, 7
    %v428 = vsub.s32 3, %v427
    %v429 = vrot.slane %v332, %v428
    %v430 = vlaneseq
    %v431 = vshrl.u32 %v430, 7
    %v432 = vsub.s32 3, %v431
    %v433 = vrot.slane %v333, %v432
    %v434 = vlaneseq
    %v435 = vshrl.u32 %v434, 7
    %v436 = vsub.s32 3, %v435
    %v437 = vrot.slane %v334, %v436
    %v438 = vmul.f32 %v420, %v425
    %v439 = vmul.f32 %v420, %v429
    %v440 = vmul.f32 %v420, %v433
    %v441 = vmul.f32 %v420, %v437
    %v442 = vadd.f32 %v414, %v438
    %v443 = vadd.f32 %v415, %v439
    %v444 = vadd.f32 %v416, %v440
    %v445 = vadd.f32 %v417, %v441
    %447 = vset.pattern.permute.xlu0 0
    %448 = vperm.xlu0 %447, %v336
    %v449 = vpop.permute.xlu0 %448
    %v451 = vadd.f32 %v442, %v449
    %v452 = vadd.f32 %v443, %v449
    %v453 = vadd.f32 %v444, %v449
    %v454 = vadd.f32 %v445, %v449
    %v455 = vmax.f32 %v451, 0.0
    %v456 = vmax.f32 %v452, 0.0
    %v457 = vmax.f32 %v453, 0.0
    %v458 = vmax.f32 %v454, 0.0
    %463 = vrot.lane.b32.xlu0 %v455, 37
    %v464 = vpop.permute.xlu0 %463
    %465 = vrot.lane.b32.xlu0 %v456, 37
    %v466 = vpop.permute.xlu0 %465
    %467 = vrot.lane.b32.xlu0 %v457, 37
    %v468 = vpop.permute.xlu0 %467
    %469 = vrot.lane.b32.xlu0 %v458, 37
    %v470 = vpop.permute.xlu0 %469
    %vm471 = vcmask 302080
    %v472 = vsel %vm471, %v464, %v466
    %v473 = vsel %vm471, %v466, %v468
    %v474 = vsel %vm471, %v468, %v470
    %478 = vst [vmem:[#allocation3] sm:$0xff] %v472
    %479 = vst [vmem:[#allocation3 + $0x8] sm:$0xff] %v473
    %vm480 = vcmask 556032
    %481 = vst.msk [vmem:[#allocation3 + $0x10] sm:$0xff] %vm480, %v474
    %v482 = vlaneseq
    %v483 = vshrl.u32 %v482, 7
    %v484 = vsub.s32 4, %v483
    %v485 = vrot.slane %v331, %v484
    %v486 = vlaneseq
    %v487 = vshrl.u32 %v486, 7
    %v488 = vsub.s32 4, %v487
    %v489 = vrot.slane %v332, %v488
    %v490 = vlaneseq
    %v491 = vshrl.u32 %v490, 7
    %v492 = vsub.s32 4, %v491
    %v493 = vrot.slane %v333, %v492
    %v494 = vlaneseq
    %v495 = vshrl.u32 %v494, 7
    %v496 = vsub.s32 4, %v495
    %v497 = vrot.slane %v334, %v496
    %v498 = vmul.f32 %v340, %v485
    %v499 = vmul.f32 %v340, %v489
    %v500 = vmul.f32 %v340, %v493
    %v501 = vmul.f32 %v340, %v497
    %v502 = vlaneseq
    %v503 = vshrl.u32 %v502, 7
    %v504 = vsub.s32 5, %v503
    %v505 = vrot.slane %v331, %v504
    %v506 = vlaneseq
    %v507 = vshrl.u32 %v506, 7
    %v508 = vsub.s32 5, %v507
    %v509 = vrot.slane %v332, %v508
    %v510 = vlaneseq
    %v511 = vshrl.u32 %v510, 7
    %v512 = vsub.s32 5, %v511
    %v513 = vrot.slane %v333, %v512
    %v514 = vlaneseq
    %v515 = vshrl.u32 %v514, 7
    %v516 = vsub.s32 5, %v515
    %v517 = vrot.slane %v334, %v516
    %v518 = vmul.f32 %v364, %v505
    %v519 = vmul.f32 %v364, %v509
    %v520 = vmul.f32 %v364, %v513
    %v521 = vmul.f32 %v364, %v517
    %v522 = vadd.f32 %v498, %v518
    %v523 = vadd.f32 %v499, %v519
    %v524 = vadd.f32 %v500, %v520
    %v525 = vadd.f32 %v501, %v521
    %v526 = vlaneseq
    %v527 = vshrl.u32 %v526, 7
    %v528 = vsub.s32 6, %v527
    %v529 = vrot.slane %v331, %v528
    %v530 = vlaneseq
    %v531 = vshrl.u32 %v530, 7
    %v532 = vsub.s32 6, %v531
    %v533 = vrot.slane %v332, %v532
    %v534 = vlaneseq
    %v535 = vshrl.u32 %v534, 7
    %v536 = vsub.s32 6, %v535
    %v537 = vrot.slane %v333, %v536
    %v538 = vlaneseq
    %v539 = vshrl.u32 %v538, 7
    %v540 = vsub.s32 6, %v539
    %v541 = vrot.slane %v334, %v540
    %v542 = vmul.f32 %v392, %v529
    %v543 = vmul.f32 %v392, %v533
    %v544 = vmul.f32 %v392, %v537
    %v545 = vmul.f32 %v392, %v541
    %v546 = vadd.f32 %v522, %v542
    %v547 = vadd.f32 %v523, %v543
    %v548 = vadd.f32 %v524, %v544
    %v549 = vadd.f32 %v525, %v545
    %v550 = vlaneseq
    %v551 = vshrl.u32 %v550, 7
    %v552 = vsub.s32 7, %v551
    %v553 = vrot.slane %v331, %v552
    %v554 = vlaneseq
    %v555 = vshrl.u32 %v554, 7
    %v556 = vsub.s32 7, %v555
    %v557 = vrot.slane %v332, %v556
    %v558 = vlaneseq
    %v559 = vshrl.u32 %v558, 7
    %v560 = vsub.s32 7, %v559
    %v561 = vrot.slane %v333, %v560
    %v562 = vlaneseq
    %v563 = vshrl.u32 %v562, 7
    %v564 = vsub.s32 7, %v563
    %v565 = vrot.slane %v334, %v564
    %v566 = vmul.f32 %v420, %v553
    %v567 = vmul.f32 %v420, %v557
    %v568 = vmul.f32 %v420, %v561
    %v569 = vmul.f32 %v420, %v565
    %v570 = vadd.f32 %v546, %v566
    %v571 = vadd.f32 %v547, %v567
    %v572 = vadd.f32 %v548, %v568
    %v573 = vadd.f32 %v549, %v569
    %v574 = vadd.f32 %v570, %v449
    %v575 = vadd.f32 %v571, %v449
    %v576 = vadd.f32 %v572, %v449
    %v577 = vadd.f32 %v573, %v449
    %v578 = vmax.f32 %v574, 0.0
    %v579 = vmax.f32 %v575, 0.0
    %v580 = vmax.f32 %v576, 0.0
    %v581 = vmax.f32 %v577, 0.0
    %586 = vrot.lane.b32.xlu0 %v578, 37
    %v587 = vpop.permute.xlu0 %586
    %588 = vrot.lane.b32.xlu0 %v579, 37
    %v589 = vpop.permute.xlu0 %588
    %590 = vrot.lane.b32.xlu0 %v580, 37
    %v591 = vpop.permute.xlu0 %590
    %592 = vrot.lane.b32.xlu0 %v581, 37
    %v593 = vpop.permute.xlu0 %592
    %v594 = vsel %vm471, %v587, %v589
    %v595 = vsel %vm471, %v589, %v591
    %v596 = vsel %vm471, %v591, %v593
    %600 = vst [vmem:[#allocation3 + $0x18] sm:$0xff] %v594
    %601 = vst [vmem:[#allocation3 + $0x20] sm:$0xff] %v595
    %602 = vst.msk [vmem:[#allocation3 + $0x28] sm:$0xff] %vm480, %v596
    // Predicated region
    $region26: #{tpu_custom_call.1} parent=1 // pred_check
      _
    $region27: #{tpu_custom_call.1} parent=1 // pred_check_branch
      %604 = sbr.rel (0) target = $region29
    $region28: #{tpu_custom_call.1} parent=1 // pred_region
      %s606 = ssub.s32 768, 768
      %607 = vsyncadd [#allocation4], %s606
      %s608 = sshll.u32 [#allocation3], 4
      %s609 = int_to_ptr.vmem [resolvable:$true] %s608
      %614 = dma.vmem_to_hbm [thread:$0]  %s609, 768, %s6, [#allocation4], 384, 384, 24
    $region29: #{tpu_custom_call.1} parent=1 // pred_fallthru
      _
    // Predicated region
    $region30: #{tpu_custom_call.1} parent=1 // pred_check
      _
    $region31: #{tpu_custom_call.1} parent=1 // pred_check_branch
      %616 = sbr.rel (0) target = $region33
    $region32: #{tpu_custom_call.1} parent=1 // pred_region
      %617 = dma.done [#allocation4], 768
    $region33: #{tpu_custom_call.1} parent=1 // pred_fallthru
      _
    %618 = vsyncpa [#allocation4], 1

</llo_original>
